<compile_context>
chip_gen: v5e
topology: v5e:2x2
jax: 0.10.0
libtpu: 0.0.40
codegen_flags: <defaults>
</compile_context>

<pallas_src>
import jax
import jax.numpy as jnp
from jax.experimental import pallas as pl
from jax.experimental.pallas import tpu as pltpu


def _proj_logsoftmax_kernel(x_ref, w_ref, b_ref, o_ref):
    # x_ref: (tile_rows, d_model)   w_ref: (d_model, vocab)   b_ref: (1, vocab)
    # Linear: logits = x @ W^T + b  (W already transposed host-side) — MXU,
    # f32 accumulation regardless of input dtype.
    logits = jnp.dot(x_ref[...], w_ref[...],
                     preferred_element_type=jnp.float32)
    logits = logits + b_ref[...].astype(jnp.float32)

    # Numerically stable log_softmax over the vocab (lane) axis.
    m = jnp.max(logits, axis=-1, keepdims=True)           # XLU reduce
    shifted = logits - m
    lse = jnp.log(jnp.sum(jnp.exp(shifted), axis=-1, keepdims=True))  # EUP+XLU
    o_ref[...] = (shifted - lse).astype(o_ref.dtype)


def _round_up(x, m):
    return ((x + m - 1) // m) * m


def _choose_tile_rows(n_rows, d_model, vocab, x_itemsize, w_itemsize,
                      budget_bytes=16 * 1024 * 1024, max_tile_rows=1024):
    """Largest 8-aligned row tile s.t. double-buffered blocks fit the budget."""
    # Resident (constant index_map) operands: W + bias (Pallas still allocates
    # double buffers for them).
    resident = 2 * (d_model * vocab + vocab) * w_itemsize
    # Per-row cost: x block (input dtype) + out block (input dtype) + f32
    # logits intermediate, inputs/outputs double-buffered.
    per_row = 2 * d_model * x_itemsize + 2 * vocab * x_itemsize + vocab * 4
    avail = max(budget_bytes - resident, per_row * 8)
    tr = min(max_tile_rows, avail // per_row)
    tr = max(8, (tr // 8) * 8)
    # Never larger than the (8-rounded) number of rows actually present.
    tr = min(tr, _round_up(n_rows, 8))
    return int(tr)


def projection_log_softmax(x, weight, bias, *, max_tile_rows=1024):
    """forward(x) = log_softmax(x @ weight.T + bias, axis=-1), Pallas on TPU.

    x:      (..., d_model)
    weight: (vocab, d_model)   -- torch nn.Linear layout
    bias:   (vocab,)
    """
    orig_shape = x.shape
    d_model = orig_shape[-1]
    vocab = weight.shape[0]

    x2 = x.reshape(-1, d_model)
    n_rows = x2.shape[0]

    tile_rows = _choose_tile_rows(
        n_rows, d_model, vocab,
        x_itemsize=jnp.dtype(x.dtype).itemsize,
        w_itemsize=jnp.dtype(weight.dtype).itemsize,
        max_tile_rows=max_tile_rows)
    grid = pl.cdiv(n_rows, tile_rows)

    w_t = weight.T                    # (d_model, vocab): lane axis = vocab
    b2 = bias.reshape(1, vocab)       # lane-major (1, vocab)

    out = pl.pallas_call(
        _proj_logsoftmax_kernel,
        out_shape=jax.ShapeDtypeStruct((n_rows, vocab), x.dtype),
        grid_spec=pltpu.PrefetchScalarGridSpec(
            num_scalar_prefetch=0,
            grid=(grid,),
            in_specs=[
                pl.BlockSpec((tile_rows, d_model), lambda i: (i, 0)),
                pl.BlockSpec((d_model, vocab), lambda i: (0, 0)),   # resident
                pl.BlockSpec((1, vocab), lambda i: (0, 0)),         # resident
            ],
            out_specs=pl.BlockSpec((tile_rows, vocab), lambda i: (i, 0)),
        ),
        compiler_params=pltpu.CompilerParams(
            dimension_semantics=("parallel",),       # megacore-shardable rows
            vmem_limit_bytes=32 * 1024 * 1024,       # safe on v5e/v6e/v7x
        ),
    )(x2, w_t, b2)

    return out.reshape(orig_shape[:-1] + (vocab,))


if __name__ == "__main__":
    B, S, D = 2, 8, 32          # batch, seq, d_model
    V = 128                     # vocab_size (multiple of 128 -> lane-dense)

    key = jax.random.PRNGKey(0)
    kx, kw, kb = jax.random.split(key, 3)
    x = jax.random.normal(kx, (B, S, D), dtype=jnp.float32)
    # Deterministic Linear params (torch layout: weight (V, D), bias (V,)).
    bound = 1.0 / (D ** 0.5)
    weight = jax.random.uniform(kw, (V, D), jnp.float32, -bound, bound)
    bias = jax.random.uniform(kb, (V,), jnp.float32, -bound, bound)

    out = projection_log_softmax(x, weight, bias)
    out = jax.block_until_ready(out)

    # Pure-JAX reference (same semantics as the PyTorch module).
    logits_ref = jnp.einsum("bsd,vd->bsv", x, weight) + bias
    ref = jax.nn.log_softmax(logits_ref, axis=-1)
    assert out.shape == (B, S, V)
    assert jnp.allclose(out, ref, atol=1e-5, rtol=1e-5), "mismatch vs reference"

    print("KERNEL_OK")
</pallas_src>

<mosaic_0001>
module attributes {stable_mosaic.version = 11 : i64} {
  func.func @_proj_logsoftmax_kernel(%arg0: i32, %arg1: memref<16x32xf32, #tpu.memory_space<vmem>>, %arg2: memref<32x128xf32, #tpu.memory_space<vmem>>, %arg3: memref<1x128xf32, #tpu.memory_space<vmem>>, %arg4: memref<16x128xf32, #tpu.memory_space<vmem>>) attributes {dimension_semantics = [#tpu.dimension_semantics<parallel>], iteration_bounds = array<i64: 1>, scalar_prefetch = 0 : i64, scratch_operands = 0 : i64, tpu.core_type = #tpu.core_type<tc>, window_params = [{transform_indices = @transform_0, window_bounds = array<i64: 16, 32>}, {pipeline_mode = #tpu.pipeline_mode<synchronous>, transform_indices = @transform_1, window_bounds = array<i64: 32, 128>}, {pipeline_mode = #tpu.pipeline_mode<synchronous>, transform_indices = @transform_2, window_bounds = array<i64: 1, 128>}, {transform_indices = @transform_3, window_bounds = array<i64: 16, 128>}]} {
    %c0 = arith.constant 0 : index
    %c0_0 = arith.constant 0 : index
    %0 = vector.load %arg1[%c0, %c0_0] : memref<16x32xf32, #tpu.memory_space<vmem>>, vector<16x32xf32>
    %c0_1 = arith.constant 0 : index
    %c0_2 = arith.constant 0 : index
    %1 = vector.load %arg2[%c0_1, %c0_2] : memref<32x128xf32, #tpu.memory_space<vmem>>, vector<32x128xf32>
    %cst = arith.constant dense<0.000000e+00> : vector<16x128xf32>
    %2 = tpu.matmul %0, %1, %cst {dimension_numbers = #tpu.dot_dimension_numbers<[1], [0], [0], [1], [0, 0, 1, 1], [], []>} : vector<16x32xf32>, vector<32x128xf32>, vector<16x128xf32> -> vector<16x128xf32>
    %c0_3 = arith.constant 0 : index
    %c0_4 = arith.constant 0 : index
    %3 = vector.load %arg3[%c0_3, %c0_4] : memref<1x128xf32, #tpu.memory_space<vmem>>, vector<1x128xf32>
    %4 = vector.broadcast %3 : vector<1x128xf32> to vector<16x128xf32>
    %5 = arith.addf %2, %4 : vector<16x128xf32>
    %cst_5 = arith.constant dense<0xFF800000> : vector<16xf32>
    %6 = vector.multi_reduction <maximumf>, %5, %cst_5 [1] : vector<16x128xf32> to vector<16xf32>
    %7 = vector.shape_cast %6 : vector<16xf32> to vector<16x1xf32>
    %8 = vector.broadcast %7 : vector<16x1xf32> to vector<16x128xf32>
    %9 = arith.subf %5, %8 : vector<16x128xf32>
    %10 = math.exp %9 : vector<16x128xf32>
    %cst_6 = arith.constant dense<0.000000e+00> : vector<16xf32>
    %11 = vector.multi_reduction <add>, %10, %cst_6 [1] : vector<16x128xf32> to vector<16xf32>
    %12 = vector.shape_cast %11 : vector<16xf32> to vector<16x1xf32>
    %13 = math.log %12 : vector<16x1xf32>
    %14 = vector.broadcast %13 : vector<16x1xf32> to vector<16x128xf32>
    %15 = arith.subf %9, %14 : vector<16x128xf32>
    %c0_7 = arith.constant 0 : index
    %c0_8 = arith.constant 0 : index
    %16 = vector.load %arg4[%c0_7, %c0_8] : memref<16x128xf32, #tpu.memory_space<vmem>>, vector<16x128xf32>
    tpu.vector_store %arg4[%c0_7, %c0_8], %15 {strides = array<i32>} : memref<16x128xf32, #tpu.memory_space<vmem>>, vector<16x128xf32>,
    return
  }
  func.func @transform_0(%arg0: i32) -> (i32, i32) {
    %c0_i32 = arith.constant 0 : i32
    %c0_i32_0 = arith.constant 0 : i32
    return %arg0, %c0_i32 : i32, i32
  }
  func.func @transform_1(%arg0: i32) -> (i32, i32) {
    %c0_i32 = arith.constant 0 : i32
    %c0_i32_0 = arith.constant 0 : i32
    %c0_i32_1 = arith.constant 0 : i32
    return %c0_i32, %c0_i32_0 : i32, i32
  }
  func.func @transform_2(%arg0: i32) -> (i32, i32) {
    %c0_i32 = arith.constant 0 : i32
    %c0_i32_0 = arith.constant 0 : i32
    %c0_i32_1 = arith.constant 0 : i32
    return %c0_i32, %c0_i32_0 : i32, i32
  }
  func.func @transform_3(%arg0: i32) -> (i32, i32) {
    %c0_i32 = arith.constant 0 : i32
    %c0_i32_0 = arith.constant 0 : i32
    return %arg0, %c0_i32 : i32, i32
  }
}

</mosaic_0001>

<llo_original>
// kernel: tpu_custom_call.1
$region0: #{tpu_custom_call.1}
  #allocation0 [shape = 'u32[]', space=smem, size = 0x4, offset = 0x4, fixed_abs, tag = 'smem constant byte address 0x4 - core index']
  #allocation1 [shape = 'u32[72,128]{1,0:T(1,128)}', space=vmem, size = 0x9000, scoped, tag = 'internal scratch']
  %s0 = inlined_call_operand.hbm [shape: f32[16,32], index: 0, kind: input, shape index: {}]
  %s1 = inlined_call_operand.hbm [shape: f32[32,128], index: 1, kind: input, shape index: {}]
  %s2 = inlined_call_operand.vmem [shape: f32[1,128], index: 2, kind: input, shape index: {}]
  %s3 = inlined_call_operand.hbm [shape: f32[16,128], index: 3, kind: output, shape index: {}]
  %s4 = sld [smem:[#allocation0]]
  $region30: #{tpu_custom_call.1} parent=0
    _
  %s6 = ssub.s32 1, %s4
  %s7 = scalar_select 0, %s6, %s4
  $region1: #{tpu_custom_call.1} parent=0
    #allocation2 [shape = 'u8[8192]{0}', space=vmem, size = 0x2000, scoped, tag = 'input window, operand 0, single buffered']
    #allocation3 [shape = 's32[1]{0}', space=sflag, size = 0x4, scoped, tag = 'scoped memory for tpu_custom_call.1']
    #allocation4 [shape = 's32[1]{0}', space=sflag, size = 0x4, scoped, tag = 'scoped memory for tpu_custom_call.1']
    #allocation5 [shape = 'u8[16384]{0}', space=vmem, size = 0x4000, scoped, tag = 'input window, operand 1, single buffered']
    #allocation6 [shape = 's32[1]{0}', space=sflag, size = 0x4, scoped, tag = 'scoped memory for tpu_custom_call.1']
    #allocation7 [shape = 'u8[8192]{0}', space=vmem, size = 0x2000, scoped, tag = 'output window, operand 0, single buffered']
    %8 = vsyncpa [#allocation3], 0
    %9 = vsyncpa [#allocation6], 0
    %10 = vsyncpa [#allocation4], 0
    // Predicated region
    $region2: #{tpu_custom_call.1} parent=1 // pred_check
      _
    $region3: #{tpu_custom_call.1} parent=1 // pred_check_branch
      %12 = sbr.rel (0) target = $region5
    $region4: #{tpu_custom_call.1} parent=1 // pred_region
      %14 = vsyncadd [#allocation3], 0
      %s15 = sshll.u32 %s0, 4
      %s16 = int_to_ptr.hbm [resolvable:$true] %s15
      %s17 = sshll.u32 [#allocation2], 4
      %s18 = int_to_ptr.vmem [resolvable:$true] %s17
      %23 = dma.hbm_to_vmem [thread:$0]  %s16, 256, %s18, [#allocation3], 128, 128, 8
    $region5: #{tpu_custom_call.1} parent=1 // pred_fallthru
      _
    // Predicated region
    $region6: #{tpu_custom_call.1} parent=1 // pred_check
      _
    $region7: #{tpu_custom_call.1} parent=1 // pred_check_branch
      %25 = sbr.rel (0) target = $region9
    $region8: #{tpu_custom_call.1} parent=1 // pred_region
      %27 = vsyncadd [#allocation6], 0
      %s28 = sshll.u32 %s1, 4
      %s29 = int_to_ptr.hbm [resolvable:$true] %s28
      %s30 = sshll.u32 [#allocation5], 4
      %s31 = int_to_ptr.vmem [resolvable:$true] %s30
      %36 = dma.hbm_to_vmem [thread:$0]  %s29, 512, %s31, [#allocation6], 128, 128, 8
    $region9: #{tpu_custom_call.1} parent=1 // pred_fallthru
      _
    // Predicated region
    $region10: #{tpu_custom_call.1} parent=1 // pred_check
      _
    $region11: #{tpu_custom_call.1} parent=1 // pred_check_branch
      %38 = sbr.rel (0) target = $region13
    $region12: #{tpu_custom_call.1} parent=1 // pred_region
      _
    $region13: #{tpu_custom_call.1} parent=1 // pred_fallthru
      _
    // Predicated region
    $region14: #{tpu_custom_call.1} parent=1 // pred_check
      _
    $region15: #{tpu_custom_call.1} parent=1 // pred_check_branch
      %40 = sbr.rel (0) target = $region17
    $region16: #{tpu_custom_call.1} parent=1 // pred_region
      %42 = dma.done [#allocation3], 256
    $region17: #{tpu_custom_call.1} parent=1 // pred_fallthru
      _
    // Predicated region
    $region18: #{tpu_custom_call.1} parent=1 // pred_check
      _
    $region19: #{tpu_custom_call.1} parent=1 // pred_check_branch
      %44 = sbr.rel (0) target = $region21
    $region20: #{tpu_custom_call.1} parent=1 // pred_region
      %46 = dma.done [#allocation6], 512
    $region21: #{tpu_custom_call.1} parent=1 // pred_fallthru
      _
    %v47 = vld [vmem:[#allocation2] sm:$0xff]
    %v48 = vld [vmem:[#allocation2 + $0x8] sm:$0xff]
    %v49 = vld [vmem:[#allocation5] sm:$0xff]
    %v50 = vld [vmem:[#allocation5 + $0x8] sm:$0xff]
    %v51 = vld [vmem:[#allocation5 + $0x10] sm:$0xff]
    %v52 = vld [vmem:[#allocation5 + $0x18] sm:$0xff]
    %v53 = vld [vmem:[%s2] sm:$0x1]
    %v55 = vperm.slane %v53, 0
    %vm57 = vcmask 261120
    %v59 = vsel %vm57, %v47, 0
    %v62 = vsel %vm57, %v48, 0
    %64 = vmatpush.msra.mxu0 0.0
    %65 = vmatpush.msra.mxu0 0.0
    %66 = vmatpush.msra.mxu0 0.0
    %67 = vmatpush.msra.mxu0 0.0
    %68 = vmatpush.msra.mxu0 0.0
    %69 = vmatpush.msra.mxu0 0.0
    %70 = vmatpush.msra.mxu0 0.0
    %71 = vmatpush.msra.mxu0 0.0
    %72 = vmatpush.msra.mxu0 0.0
    %73 = vmatpush.msra.mxu0 0.0
    %74 = vmatpush.msra.mxu0 0.0
    %75 = vmatpush.msra.mxu0 0.0
    %76 = vmatpush.msra.mxu0 %v52
    %77 = vmatpush.msra.mxu0 %v51
    %78 = vmatpush.msra.mxu0 %v50
    %79 = vmatpush.msra.mxu0 %v49
    %80 = vmatmul.f32.gmra.mxu0 %v59
    %v81 = vpop.f32.mrf.mxu0
    %v82 = vadd.f32 %v55, %v81
    %83 = vmatmul.f32.gmra.mxu0 %v62
    %v84 = vpop.f32.mrf.mxu0
    %v85 = vadd.f32 %v55, %v84
    %86 = vdwg.mxu0
    %87 = vmax.xlane.f32.xlu0 %v82
    %v88 = vpop.xlane.xlu0 %87
    %89 = vmax.xlane.f32.xlu0 %v85
    %v90 = vpop.xlane.xlu0 %89
    %v91 = vsub.f32 %v82, %v88
    %v92 = vsub.f32 %v85, %v90
    %v93 = vmul.f32 %v91, 1.442695
    %v94 = vpow.pop %v93
    %v95 = vmul.f32 %v92, 1.442695
    %v96 = vpow.pop %v95
    %97 = vadd.xlane.f32.xlu0 %v94
    %v98 = vpop.xlane.xlu0 %97
    %99 = vadd.xlane.f32.xlu0 %v96
    %v100 = vpop.xlane.xlu0 %99
    %v101 = vlog2.pop %v98
    %v102 = vmul.f32 %v101, 0.6931472
    %v103 = vlog2.pop %v100
    %v104 = vmul.f32 %v103, 0.6931472
    %v105 = vsub.f32 %v91, %v102
    %v106 = vsub.f32 %v92, %v104
    %107 = vst [vmem:[#allocation7] sm:$0xff] %v105
    %108 = vst [vmem:[#allocation7 + $0x8] sm:$0xff] %v106
    // Predicated region
    $region22: #{tpu_custom_call.1} parent=1 // pred_check
      _
    $region23: #{tpu_custom_call.1} parent=1 // pred_check_branch
      %110 = sbr.rel (0) target = $region25
    $region24: #{tpu_custom_call.1} parent=1 // pred_region
      %112 = vsyncadd [#allocation4], 0
      %s113 = sshll.u32 [#allocation7], 4
      %s114 = int_to_ptr.vmem [resolvable:$true] %s113
      %s115 = sshll.u32 %s3, 4
      %s116 = int_to_ptr.hbm [resolvable:$true] %s115
      %121 = dma.vmem_to_hbm [thread:$0]  %s114, 256, %s116, [#allocation4], 128, 128, 8
    $region25: #{tpu_custom_call.1} parent=1 // pred_fallthru
      _
    // Predicated region
    $region26: #{tpu_custom_call.1} parent=1 // pred_check
      _
    $region27: #{tpu_custom_call.1} parent=1 // pred_check_branch
      %123 = sbr.rel (0) target = $region29
    $region28: #{tpu_custom_call.1} parent=1 // pred_region
      %125 = dma.done [#allocation4], 256
    $region29: #{tpu_custom_call.1} parent=1 // pred_fallthru
      _
    %126 = vsyncpa [#allocation3], 1
    %127 = vsyncpa [#allocation6], 1
    %128 = vsyncpa [#allocation4], 1

</llo_original>
